<compile_context>
chip_gen: v6e
topology: v6e:2x2x1
jax: 0.10.0
libtpu: 0.0.40
codegen_flags: <defaults>
</compile_context>

<pallas_src>
import jax
import jax.numpy as jnp
from jax.experimental import pallas as pl
from jax.experimental.pallas import tpu as pltpu


def _make_cfn_kernel(in_dim, neg_inv_dx, l1_vpu, l3_vpu, fuse_diff):
    """Kernel factory; static config is baked in via closure."""

    def kernel(x_ref, wa_t_ref, ba_ref, wb_t_ref, bb_ref, wc_ref, bc_ref, o_ref):
        # x_ref:    [in_dim, tn]  window columns (lane-dense)
        # wa_t_ref: [hidden, in_dim], ba_ref: [hidden, 1]
        # wb_t_ref: [hidden, hidden] (bf16 or f32), bb_ref: [hidden, 1]
        # wc_ref:   [hidden, out_dim] (VPU path) or [out_dim, hidden] (dot path)
        # bc_ref:   [out_dim, 1]
        # o_ref:    [out_dim, tn]  (either u or fused flux F, lane-dense)
        x = x_ref[...]

        # ---- layer 1: K = in_dim is tiny -> unrolled VPU FMA, not the MXU ----
        if l1_vpu:
            h = wa_t_ref[:, 0:1] * x[0:1, :]
            for o in range(1, in_dim):
                h = h + wa_t_ref[:, o:o + 1] * x[o:o + 1, :]
            h = h + ba_ref[...]
        else:
            h = jnp.dot(wa_t_ref[...], x,
                        preferred_element_type=jnp.float32) + ba_ref[...]
        h = jnp.maximum(h, 0.0)

        # ---- layer 2: the only real matmul; bf16 operands, f32 accumulation --
        h = jnp.dot(wb_t_ref[...], h.astype(wb_t_ref.dtype),
                    preferred_element_type=jnp.float32) + bb_ref[...]
        h = jnp.maximum(h, 0.0)

        # ---- layer 3: out_dim == 1 -> VPU broadcast + sublane (XLU) reduce ---
        if l3_vpu:
            u = jnp.sum(wc_ref[...] * h, axis=0, keepdims=True) + bc_ref[...]
        else:
            u = jnp.dot(wc_ref[...], h,
                        preferred_element_type=jnp.float32) + bc_ref[...]

        if fuse_diff:
            # F[c] = -1/dx * (u[c] - u[c-1]); column 0 of each batch group (and
            # of the tile) is discarded by the wrapper, so the wrap-around
            # value pulled in by the roll is never read.
            u_prev = pltpu.roll(u, shift=1, axis=1)
            o_ref[...] = (neg_inv_dx * (u - u_prev)).astype(o_ref.dtype)
        else:
            o_ref[...] = u.astype(o_ref.dtype)

    return kernel


def cfn_forward_pallas(x, params, *, p, q, delta_x,
                       lane_tile_cap=8192, use_bf16=True):
    """CFN.forward: x [batch, x_dim] -> F [batch, x_dim - p - q, out_dim]."""
    assert len(params) == 3, "kernel is specialized for num_layer == 3"
    batch, x_dim = x.shape
    num_pos = x_dim - p - q
    in_dim = p + q + 1
    G = num_pos + 1                         # window positions per batch row

    (wa, ba), (wb, bb), (wc, bc) = params
    hidden = wa.shape[1]
    out_dim = wc.shape[1]

    # -- window slab: columns = batch-major window positions (lane axis) ------
    # xe prepends the single periodically-wrapped element x[:, -1] needed by
    # the extra window at position p-1 (supplies u(window j-1) at j == p).
    xe = jnp.concatenate([x[:, -1:], x], axis=1).astype(jnp.float32)
    rows = [xe[:, o:o + G].reshape(batch * G) for o in range(in_dim)]
    slab_t = jnp.stack(rows, axis=0)        # [in_dim, m_all]
    m_all = batch * G

    # -- balanced lane tiling ---------------------------------------------------
    m128 = pl.cdiv(m_all, 128) * 128
    num_tiles = max(1, pl.cdiv(m128, lane_tile_cap))
    if m128 >= 1024:
        num_tiles = max(num_tiles, 2)       # let v7x shard across its 2 TCs
    tn = pl.cdiv(pl.cdiv(m128, num_tiles), 128) * 128
    m_pad = num_tiles * tn
    if m_pad != m_all:
        slab_t = jnp.pad(slab_t, ((0, 0), (0, m_pad - m_all)))

    # Fuse the flux diff in-kernel only when every tile boundary is also a
    # batch-group boundary (always true single-tile); otherwise the roll at a
    # tile's first column would need the previous tile -> do it in the wrapper.
    fuse_diff = (num_tiles == 1) or (tn % G == 0)

    # -- transposed params so M stays on the lane axis -------------------------
    l1_vpu = in_dim <= 8
    l3_vpu = out_dim == 1
    wa_t = wa.T.astype(jnp.float32)                                  # [hidden, in_dim]
    ba_t = ba.T.astype(jnp.float32)                                  # [hidden, 1]
    wb_t = wb.T.astype(jnp.bfloat16 if use_bf16 else jnp.float32)    # [hidden, hidden]
    bb_t = bb.T.astype(jnp.float32)                                  # [hidden, 1]
    wc_arg = (wc if l3_vpu else wc.T).astype(jnp.float32)            # [hid,out] | [out,hid]
    bc_t = bc.T.astype(jnp.float32)                                  # [out_dim, 1]

    col_spec = lambda i: (0, i)
    full_spec = lambda i: (0, 0)

    wbytes = (2 if use_bf16 else 4) * hidden * hidden
    cost = pl.CostEstimate(
        flops=2 * m_pad * (in_dim * hidden + hidden * hidden + hidden * out_dim),
        transcendentals=0,
        bytes_accessed=4 * (in_dim + out_dim) * m_pad + wbytes
                       + 4 * (in_dim * hidden + hidden * out_dim + 2 * hidden + out_dim),
    )

    kernel = _make_cfn_kernel(in_dim, -1.0 / delta_x, l1_vpu, l3_vpu, fuse_diff)

    out = pl.pallas_call(
        kernel,
        out_shape=jax.ShapeDtypeStruct((out_dim, m_pad), jnp.float32),
        grid_spec=pltpu.PrefetchScalarGridSpec(
            num_scalar_prefetch=0,
            grid=(num_tiles,),
            in_specs=[
                pl.BlockSpec((in_dim, tn), col_spec),
                pl.BlockSpec((hidden, in_dim), full_spec),
                pl.BlockSpec((hidden, 1), full_spec),
                pl.BlockSpec((hidden, hidden), full_spec),
                pl.BlockSpec((hidden, 1), full_spec),
                pl.BlockSpec(wc_arg.shape, full_spec),
                pl.BlockSpec((out_dim, 1), full_spec),
            ],
            out_specs=pl.BlockSpec((out_dim, tn), col_spec),
        ),
        compiler_params=pltpu.CompilerParams(
            dimension_semantics=("parallel",)),
        cost_estimate=cost,
    )(slab_t, wa_t, ba_t, wb_t, bb_t, wc_arg, bc_t)

    vals = out[:, :m_all].T.reshape(batch, G, out_dim)
    if fuse_diff:
        return vals[:, 1:, :]                              # already -1/dx * diff
    return (-1.0 / delta_x) * (vals[:, 1:, :] - vals[:, :-1, :])


def cfn_forward_ref(x, params, *, p, q, delta_x):
    """Pure-JAX reference of the (de-bugged) CFN.forward semantics."""
    batch, x_dim = x.shape
    num_pos = x_dim - p - q
    in_dim = p + q + 1
    js = jnp.arange(p, x_dim - q)
    offs = jnp.arange(-p, q + 1)
    idx1 = js[:, None] + offs[None, :]
    idx2 = (idx1 - 1) % x_dim                    # periodic wrap at j == p edge
    w1 = x[:, idx1].reshape(batch * num_pos, in_dim)
    w2 = x[:, idx2].reshape(batch * num_pos, in_dim)

    def mlp(v):
        h = v
        for i, (w, b) in enumerate(params):
            h = h @ w + b
            if i < len(params) - 1:
                h = jax.nn.relu(h)
        return h

    out_dim = params[-1][0].shape[1]
    f = -1.0 / delta_x * (mlp(w1) - mlp(w2))
    return f.reshape(batch, num_pos, out_dim)


def init_cfn_params(key, in_dim, hidden_dim, out_dim, num_layer):
    """Deterministic Linear params (PyTorch-style uniform), stored as [in, out]."""
    dims = [in_dim] + [hidden_dim] * (num_layer - 1) + [out_dim]
    params = []
    for i in range(num_layer):
        fan_in, fan_out = dims[i], dims[i + 1]
        key, kw, kb = jax.random.split(key, 3)
        bound = 1.0 / jnp.sqrt(float(fan_in))
        w = jax.random.uniform(kw, (fan_in, fan_out), jnp.float32, -bound, bound)
        b = jax.random.uniform(kb, (1, fan_out), jnp.float32, -bound, bound)
        params.append((w, b))
    return params


if __name__ == "__main__":
    key = jax.random.PRNGKey(0)
    k1, k2, k3 = jax.random.split(key, 3)

    def run_case(case_key, batch, x_dim, p, q, hidden_dim, out_dim, num_layer,
                 delta_x, use_bf16, tol):
        in_dim = p + q + 1
        kx, kp = jax.random.split(case_key)
        x = jax.random.normal(kx, (batch, x_dim), dtype=jnp.float32)
        params = init_cfn_params(kp, in_dim, hidden_dim, out_dim, num_layer)
        out = cfn_forward_pallas(x, params, p=p, q=q, delta_x=delta_x,
                                 use_bf16=use_bf16)
        out = jax.block_until_ready(out)
        ref = cfn_forward_ref(x, params, p=p, q=q, delta_x=delta_x)
        assert out.shape == (batch, x_dim - p - q, out_dim), out.shape
        err = float(jnp.max(jnp.abs(out - ref)))
        assert jnp.allclose(out, ref, rtol=tol, atol=tol), \
            f"mismatch vs reference, max abs err = {err}"

    # CFN(in_dim=2, hidden=32, out_dim=1, num_layer=3, delta_x=0.1, p=1, q=0)
    # 1) f32 middle matmul -> tight tolerance; single tile, fused flux epilogue.
    run_case(k1, 8, 16, 1, 0, 32, 1, 3, 0.1, use_bf16=False, tol=1e-3)
    # 2) bf16 middle matmul on the MXU (review item); bf16 rounding is amplified
    #    by the -1/dx adjacent-window difference, so compare loosely.
    run_case(k2, 8, 16, 1, 0, 32, 1, 3, 0.1, use_bf16=True, tol=5e-2)
    # 3) larger case exercising the multi-tile "parallel" grid and the
    #    wrapper-side flux-difference fallback (tn % G != 0).
    run_case(k3, 16, 100, 1, 0, 32, 1, 3, 0.1, use_bf16=False, tol=1e-3)

    print("KERNEL_OK")
</pallas_src>

<mosaic_0001>
module attributes {stable_mosaic.version = 11 : i64} {
  func.func @kernel(%arg0: i32, %arg1: memref<2x128xf32, #tpu.memory_space<vmem>>, %arg2: memref<32x2xf32, #tpu.memory_space<vmem>>, %arg3: memref<32x1xf32, #tpu.memory_space<vmem>>, %arg4: memref<32x32xf32, #tpu.memory_space<vmem>>, %arg5: memref<32x1xf32, #tpu.memory_space<vmem>>, %arg6: memref<32x1xf32, #tpu.memory_space<vmem>>, %arg7: memref<1x1xf32, #tpu.memory_space<vmem>>, %arg8: memref<1x128xf32, #tpu.memory_space<vmem>>) attributes {dimension_semantics = [#tpu.dimension_semantics<parallel>], iteration_bounds = array<i64: 1>, scalar_prefetch = 0 : i64, scratch_operands = 0 : i64, tpu.core_type = #tpu.core_type<tc>, window_params = [{transform_indices = @transform_0, window_bounds = array<i64: 2, 128>}, {pipeline_mode = #tpu.pipeline_mode<synchronous>, transform_indices = @transform_1, window_bounds = array<i64: 32, 2>}, {pipeline_mode = #tpu.pipeline_mode<synchronous>, transform_indices = @transform_2, window_bounds = array<i64: 32, 1>}, {pipeline_mode = #tpu.pipeline_mode<synchronous>, transform_indices = @transform_3, window_bounds = array<i64: 32, 32>}, {pipeline_mode = #tpu.pipeline_mode<synchronous>, transform_indices = @transform_4, window_bounds = array<i64: 32, 1>}, {pipeline_mode = #tpu.pipeline_mode<synchronous>, transform_indices = @transform_5, window_bounds = array<i64: 32, 1>}, {pipeline_mode = #tpu.pipeline_mode<synchronous>, transform_indices = @transform_6, window_bounds = array<i64: 1, 1>}, {transform_indices = @transform_7, window_bounds = array<i64: 1, 128>}]} {
    %c0 = arith.constant 0 : index
    %c0_0 = arith.constant 0 : index
    %0 = vector.load %arg1[%c0, %c0_0] : memref<2x128xf32, #tpu.memory_space<vmem>>, vector<2x128xf32>
    %c0_1 = arith.constant 0 : index
    %c0_2 = arith.constant 0 : index
    %1 = vector.load %arg2[%c0_1, %c0_2] : memref<32x2xf32, #tpu.memory_space<vmem>>, vector<32x1xf32>
    %2 = vector.extract_strided_slice %0 {offsets = [0, 0], sizes = [1, 128], strides = [1, 1]} : vector<2x128xf32> to vector<1x128xf32>
    %3 = vector.broadcast %1 : vector<32x1xf32> to vector<32x128xf32>
    %4 = vector.broadcast %2 : vector<1x128xf32> to vector<32x128xf32>
    %5 = arith.mulf %3, %4 : vector<32x128xf32>
    %c0_3 = arith.constant 0 : index
    %c1 = arith.constant 1 : index
    %6 = vector.load %arg2[%c0_3, %c1] : memref<32x2xf32, #tpu.memory_space<vmem>>, vector<32x1xf32>
    %7 = vector.extract_strided_slice %0 {offsets = [1, 0], sizes = [1, 128], strides = [1, 1]} : vector<2x128xf32> to vector<1x128xf32>
    %8 = vector.broadcast %6 : vector<32x1xf32> to vector<32x128xf32>
    %9 = vector.broadcast %7 : vector<1x128xf32> to vector<32x128xf32>
    %10 = arith.mulf %8, %9 : vector<32x128xf32>
    %11 = arith.addf %5, %10 : vector<32x128xf32>
    %c0_4 = arith.constant 0 : index
    %c0_5 = arith.constant 0 : index
    %12 = vector.load %arg3[%c0_4, %c0_5] : memref<32x1xf32, #tpu.memory_space<vmem>>, vector<32x1xf32>
    %13 = vector.broadcast %12 : vector<32x1xf32> to vector<32x128xf32>
    %14 = arith.addf %11, %13 : vector<32x128xf32>
    %cst = arith.constant 0.000000e+00 : f32
    %15 = vector.broadcast %cst : f32 to vector<32x128xf32>
    %16 = arith.maximumf %14, %15 : vector<32x128xf32>
    %c0_6 = arith.constant 0 : index
    %c0_7 = arith.constant 0 : index
    %17 = vector.load %arg4[%c0_6, %c0_7] : memref<32x32xf32, #tpu.memory_space<vmem>>, vector<32x32xf32>
    %cst_8 = arith.constant dense<0.000000e+00> : vector<32x128xf32>
    %18 = tpu.matmul %17, %16, %cst_8 {dimension_numbers = #tpu.dot_dimension_numbers<[1], [0], [0], [1], [0, 0, 1, 1], [], []>} : vector<32x32xf32>, vector<32x128xf32>, vector<32x128xf32> -> vector<32x128xf32>
    %c0_9 = arith.constant 0 : index
    %c0_10 = arith.constant 0 : index
    %19 = vector.load %arg5[%c0_9, %c0_10] : memref<32x1xf32, #tpu.memory_space<vmem>>, vector<32x1xf32>
    %20 = vector.broadcast %19 : vector<32x1xf32> to vector<32x128xf32>
    %21 = arith.addf %18, %20 : vector<32x128xf32>
    %cst_11 = arith.constant 0.000000e+00 : f32
    %22 = vector.broadcast %cst_11 : f32 to vector<32x128xf32>
    %23 = arith.maximumf %21, %22 : vector<32x128xf32>
    %c0_12 = arith.constant 0 : index
    %c0_13 = arith.constant 0 : index
    %24 = vector.load %arg6[%c0_12, %c0_13] : memref<32x1xf32, #tpu.memory_space<vmem>>, vector<32x1xf32>
    %25 = vector.broadcast %24 : vector<32x1xf32> to vector<32x128xf32>
    %26 = arith.mulf %25, %23 : vector<32x128xf32>
    %cst_14 = arith.constant dense<0.000000e+00> : vector<128xf32>
    %27 = vector.multi_reduction <add>, %26, %cst_14 [0] : vector<32x128xf32> to vector<128xf32>
    %28 = vector.shape_cast %27 : vector<128xf32> to vector<1x128xf32>
    %c0_15 = arith.constant 0 : index
    %c0_16 = arith.constant 0 : index
    %29 = vector.load %arg7[%c0_15, %c0_16] : memref<1x1xf32, #tpu.memory_space<vmem>>, vector<1x1xf32>
    %30 = vector.broadcast %29 : vector<1x1xf32> to vector<1x128xf32>
    %31 = arith.addf %28, %30 : vector<1x128xf32>
    %c1_i32 = arith.constant 1 : i32
    %32 = tpu.dynamic_rotate %31 by %c1_i32 dim 1 : vector<1x128xf32>, i32 -> vector<1x128xf32>
    %33 = arith.subf %31, %32 : vector<1x128xf32>
    %cst_17 = arith.constant -1.000000e+01 : f32
    %34 = vector.broadcast %cst_17 : f32 to vector<1x128xf32>
    %35 = arith.mulf %34, %33 : vector<1x128xf32>
    %c0_18 = arith.constant 0 : index
    %c0_19 = arith.constant 0 : index
    %36 = vector.load %arg8[%c0_18, %c0_19] : memref<1x128xf32, #tpu.memory_space<vmem>>, vector<1x128xf32>
    tpu.vector_store %arg8[%c0_18, %c0_19], %35 {strides = array<i32>} : memref<1x128xf32, #tpu.memory_space<vmem>>, vector<1x128xf32>,
    return
  }
  func.func @transform_0(%arg0: i32) -> (i32, i32) {
    %c0_i32 = arith.constant 0 : i32
    %c0_i32_0 = arith.constant 0 : i32
    return %c0_i32, %arg0 : i32, i32
  }
  func.func @transform_1(%arg0: i32) -> (i32, i32) {
    %c0_i32 = arith.constant 0 : i32
    %c0_i32_0 = arith.constant 0 : i32
    %c0_i32_1 = arith.constant 0 : i32
    return %c0_i32, %c0_i32_0 : i32, i32
  }
  func.func @transform_2(%arg0: i32) -> (i32, i32) {
    %c0_i32 = arith.constant 0 : i32
    %c0_i32_0 = arith.constant 0 : i32
    %c0_i32_1 = arith.constant 0 : i32
    return %c0_i32, %c0_i32_0 : i32, i32
  }
  func.func @transform_3(%arg0: i32) -> (i32, i32) {
    %c0_i32 = arith.constant 0 : i32
    %c0_i32_0 = arith.constant 0 : i32
    %c0_i32_1 = arith.constant 0 : i32
    return %c0_i32, %c0_i32_0 : i32, i32
  }
  func.func @transform_4(%arg0: i32) -> (i32, i32) {
    %c0_i32 = arith.constant 0 : i32
    %c0_i32_0 = arith.constant 0 : i32
    %c0_i32_1 = arith.constant 0 : i32
    return %c0_i32, %c0_i32_0 : i32, i32
  }
  func.func @transform_5(%arg0: i32) -> (i32, i32) {
    %c0_i32 = arith.constant 0 : i32
    %c0_i32_0 = arith.constant 0 : i32
    %c0_i32_1 = arith.constant 0 : i32
    return %c0_i32, %c0_i32_0 : i32, i32
  }
  func.func @transform_6(%arg0: i32) -> (i32, i32) {
    %c0_i32 = arith.constant 0 : i32
    %c0_i32_0 = arith.constant 0 : i32
    %c0_i32_1 = arith.constant 0 : i32
    return %c0_i32, %c0_i32_0 : i32, i32
  }
  func.func @transform_7(%arg0: i32) -> (i32, i32) {
    %c0_i32 = arith.constant 0 : i32
    %c0_i32_0 = arith.constant 0 : i32
    return %c0_i32, %arg0 : i32, i32
  }
}

</mosaic_0001>

<llo_original>
// kernel: tpu_custom_call.1
$region0: #{tpu_custom_call.1}
  #allocation0 [shape = 'u32[]', space=smem, size = 0x4, offset = 0x4, fixed_abs, tag = 'smem constant byte address 0x4 - core index']
  #allocation1 [shape = 'u32[144,128]{1,0:T(1,128)}', space=vmem, size = 0x12000, scoped, tag = 'internal scratch']
  #allocation2 [shape = 'f32[1,1]{1,0:T(1,128)S(1)}', space=vmem, size = 0x200, scoped, tag = 'scoped memory for tpu_custom_call.1']
  %s0 = inlined_call_operand.vmem [shape: f32[2,128], index: 0, kind: input, shape index: {}]
  %s1 = inlined_call_operand.vmem [shape: f32[32,2], index: 1, kind: input, shape index: {}]
  %s2 = inlined_call_operand.vmem [shape: f32[32,1], index: 2, kind: input, shape index: {}]
  %s3 = inlined_call_operand.vmem [shape: f32[32,32], index: 3, kind: input, shape index: {}]
  %s4 = inlined_call_operand.vmem [shape: f32[32,1], index: 4, kind: input, shape index: {}]
  %s5 = inlined_call_operand.vmem [shape: f32[32,1], index: 5, kind: input, shape index: {}]
  %s6 = inlined_call_operand.<no memory space> [shape: f32[1,1], index: 6, kind: input, shape index: {}]
  %s7 = inlined_call_operand.hbm [shape: f32[1,128], index: 7, kind: output, shape index: {}]
  %s8 = sld [smem:[#allocation0]]
  $region38: #{tpu_custom_call.1} parent=0
    _
  %s10 = ssub.s32 1, %s8
  %s11 = scalar_select 0, %s10, %s8
  %v12 = vstv %s6
  %13 = vst [vmem:[#allocation2] sm:$0x1] %v12
  $region1: #{tpu_custom_call.1} parent=0
    #allocation3 [shape = 'u8[512]{0}', space=vmem, size = 0x400, scoped, tag = 'output window, operand 0, single buffered']
    #allocation4 [shape = 's32[1]{0}', space=sflag, size = 0x4, scoped, tag = 'scoped memory for tpu_custom_call.1']
    %14 = vsyncpa [#allocation4], 0
    // Predicated region
    $region2: #{tpu_custom_call.1} parent=1 // pred_check
      _
    $region3: #{tpu_custom_call.1} parent=1 // pred_check_branch
      %16 = sbr.rel (0) target = $region5
    $region4: #{tpu_custom_call.1} parent=1 // pred_region
      _
    $region5: #{tpu_custom_call.1} parent=1 // pred_fallthru
      _
    // Predicated region
    $region6: #{tpu_custom_call.1} parent=1 // pred_check
      _
    $region7: #{tpu_custom_call.1} parent=1 // pred_check_branch
      %18 = sbr.rel (0) target = $region9
    $region8: #{tpu_custom_call.1} parent=1 // pred_region
      _
    $region9: #{tpu_custom_call.1} parent=1 // pred_fallthru
      _
    // Predicated region
    $region10: #{tpu_custom_call.1} parent=1 // pred_check
      _
    $region11: #{tpu_custom_call.1} parent=1 // pred_check_branch
      %20 = sbr.rel (0) target = $region13
    $region12: #{tpu_custom_call.1} parent=1 // pred_region
      _
    $region13: #{tpu_custom_call.1} parent=1 // pred_fallthru
      _
    // Predicated region
    $region14: #{tpu_custom_call.1} parent=1 // pred_check
      _
    $region15: #{tpu_custom_call.1} parent=1 // pred_check_branch
      %22 = sbr.rel (0) target = $region17
    $region16: #{tpu_custom_call.1} parent=1 // pred_region
      _
    $region17: #{tpu_custom_call.1} parent=1 // pred_fallthru
      _
    // Predicated region
    $region18: #{tpu_custom_call.1} parent=1 // pred_check
      _
    $region19: #{tpu_custom_call.1} parent=1 // pred_check_branch
      %24 = sbr.rel (0) target = $region21
    $region20: #{tpu_custom_call.1} parent=1 // pred_region
      _
    $region21: #{tpu_custom_call.1} parent=1 // pred_fallthru
      _
    // Predicated region
    $region22: #{tpu_custom_call.1} parent=1 // pred_check
      _
    $region23: #{tpu_custom_call.1} parent=1 // pred_check_branch
      %26 = sbr.rel (0) target = $region25
    $region24: #{tpu_custom_call.1} parent=1 // pred_region
      _
    $region25: #{tpu_custom_call.1} parent=1 // pred_fallthru
      _
    // Predicated region
    $region26: #{tpu_custom_call.1} parent=1 // pred_check
      _
    $region27: #{tpu_custom_call.1} parent=1 // pred_check_branch
      %28 = sbr.rel (0) target = $region29
    $region28: #{tpu_custom_call.1} parent=1 // pred_region
      _
    $region29: #{tpu_custom_call.1} parent=1 // pred_fallthru
      _
    %v29 = vld [vmem:[%s0] sm:$0x3]
    %v30 = vld [vmem:[%s1] sm:$0xff]
    %v31 = vld [vmem:[%s1 + $0x8] sm:$0xff]
    %v32 = vld [vmem:[%s1 + $0x10] sm:$0xff]
    %v33 = vld [vmem:[%s1 + $0x18] sm:$0xff]
    %35 = vset.pattern.permute.xlu0 0
    %36 = vperm.xlu0 %35, %v30
    %v37 = vpop.permute.xlu0 %36
    %40 = vset.pattern.permute.xlu0 0
    %41 = vperm.xlu0 %40, %v31
    %v42 = vpop.permute.xlu0 %41
    %45 = vset.pattern.permute.xlu0 0
    %46 = vperm.xlu0 %45, %v32
    %v47 = vpop.permute.xlu0 %46
    %50 = vset.pattern.permute.xlu0 0
    %51 = vperm.xlu0 %50, %v33
    %v52 = vpop.permute.xlu0 %51
    %v54 = vlaneseq
    %v55 = vshrl.u32 %v54, 7
    %v56 = vsub.s32 0, %v55
    %v57 = vrot.slane %v29, %v56
    %v58 = vmul.f32 %v37, %v57
    %v59 = vmul.f32 %v42, %v57
    %v60 = vmul.f32 %v47, %v57
    %v61 = vmul.f32 %v52, %v57
    %62 = vset.pattern.permute.xlu0 1
    %63 = vperm.xlu0 %62, %v30
    %v64 = vpop.permute.xlu0 %63
    %66 = vset.pattern.permute.xlu0 1
    %67 = vperm.xlu0 %66, %v31
    %v68 = vpop.permute.xlu0 %67
    %70 = vset.pattern.permute.xlu0 1
    %71 = vperm.xlu0 %70, %v32
    %v72 = vpop.permute.xlu0 %71
    %74 = vset.pattern.permute.xlu0 1
    %75 = vperm.xlu0 %74, %v33
    %v76 = vpop.permute.xlu0 %75
    %v78 = vlaneseq
    %v79 = vshrl.u32 %v78, 7
    %v80 = vsub.s32 1, %v79
    %v81 = vrot.slane %v29, %v80
    %v82 = vmul.f32 %v64, %v81
    %v83 = vmul.f32 %v68, %v81
    %v84 = vmul.f32 %v72, %v81
    %v85 = vmul.f32 %v76, %v81
    %v86 = vadd.f32 %v58, %v82
    %v87 = vadd.f32 %v59, %v83
    %v88 = vadd.f32 %v60, %v84
    %v89 = vadd.f32 %v61, %v85
    %v90 = vld [vmem:[%s2] sm:$0xff]
    %v91 = vld [vmem:[%s2 + $0x8] sm:$0xff]
    %v92 = vld [vmem:[%s2 + $0x10] sm:$0xff]
    %v93 = vld [vmem:[%s2 + $0x18] sm:$0xff]
    %95 = vset.pattern.permute.xlu0 0
    %96 = vperm.xlu0 %95, %v90
    %v97 = vpop.permute.xlu0 %96
    %100 = vset.pattern.permute.xlu0 0
    %101 = vperm.xlu0 %100, %v91
    %v102 = vpop.permute.xlu0 %101
    %105 = vset.pattern.permute.xlu0 0
    %106 = vperm.xlu0 %105, %v92
    %v107 = vpop.permute.xlu0 %106
    %110 = vset.pattern.permute.xlu0 0
    %111 = vperm.xlu0 %110, %v93
    %v112 = vpop.permute.xlu0 %111
    %v114 = vadd.f32 %v86, %v97
    %v115 = vadd.f32 %v87, %v102
    %v116 = vadd.f32 %v88, %v107
    %v117 = vadd.f32 %v89, %v112
    %v118 = vmax.f32 %v114, 0.0
    %v119 = vmax.f32 %v115, 0.0
    %v120 = vmax.f32 %v116, 0.0
    %v121 = vmax.f32 %v117, 0.0
    %v122 = vld [vmem:[%s3] sm:$0xff]
    %v123 = vld [vmem:[%s3 + $0x8] sm:$0xff]
    %v124 = vld [vmem:[%s3 + $0x10] sm:$0xff]
    %v125 = vld [vmem:[%s3 + $0x18] sm:$0xff]
    %v126 = vld [vmem:[%s4] sm:$0xff]
    %v127 = vld [vmem:[%s4 + $0x8] sm:$0xff]
    %v128 = vld [vmem:[%s4 + $0x10] sm:$0xff]
    %v129 = vld [vmem:[%s4 + $0x18] sm:$0xff]
    %131 = vset.pattern.permute.xlu0 0
    %132 = vperm.xlu0 %131, %v126
    %v133 = vpop.permute.xlu0 %132
    %136 = vset.pattern.permute.xlu0 0
    %137 = vperm.xlu0 %136, %v127
    %v138 = vpop.permute.xlu0 %137
    %141 = vset.pattern.permute.xlu0 0
    %142 = vperm.xlu0 %141, %v128
    %v143 = vpop.permute.xlu0 %142
    %146 = vset.pattern.permute.xlu0 0
    %147 = vperm.xlu0 %146, %v129
    %v148 = vpop.permute.xlu0 %147
    %vm150 = vcmask 261120
    %v152 = vsel %vm150, %v122, 0
    %v155 = vsel %vm150, %v123, 0
    %v158 = vsel %vm150, %v124, 0
    %v161 = vsel %vm150, %v125, 0
    %163 = vmatprep.subr.mxu0 0.0
    %164 = vmatpush1.msra.mxu0 0.0
    %165 = vmatprep.subr.mxu0 0.0
    %166 = vmatpush1.msra.mxu0 0.0
    %167 = vmatprep.subr.mxu0 0.0
    %168 = vmatpush1.msra.mxu0 0.0
    %169 = vmatprep.subr.mxu0 0.0
    %170 = vmatpush1.msra.mxu0 0.0
    %171 = vmatprep.subr.mxu0 0.0
    %172 = vmatpush1.msra.mxu0 0.0
    %173 = vmatprep.subr.mxu0 0.0
    %174 = vmatpush1.msra.mxu0 0.0
    %175 = vmatprep.subr.mxu0 0.0
    %176 = vmatpush1.msra.mxu0 0.0
    %177 = vmatprep.subr.mxu0 0.0
    %178 = vmatpush1.msra.mxu0 0.0
    %179 = vmatprep.subr.mxu0 0.0
    %180 = vmatpush1.msra.mxu0 0.0
    %181 = vmatprep.subr.mxu0 0.0
    %182 = vmatpush1.msra.mxu0 0.0
    %183 = vmatprep.subr.mxu0 0.0
    %184 = vmatpush1.msra.mxu0 0.0
    %185 = vmatprep.subr.mxu0 0.0
    %186 = vmatpush1.msra.mxu0 0.0
    %187 = vmatprep.subr.mxu0 0.0
    %188 = vmatpush1.msra.mxu0 %v121
    %189 = vmatprep.subr.mxu0 0.0
    %190 = vmatpush1.msra.mxu0 %v120
    %191 = vmatprep.subr.mxu0 0.0
    %192 = vmatpush1.msra.mxu0 %v119
    %193 = vmatprep.subr.mxu0 0.0
    %194 = vmatpush1.msra.mxu0 %v118
    %195 = vmatprep.subr.mxu0 0.0
    %196 = vmatpush2.msra.mxu0 0.0
    %197 = vmatprep.subr.mxu0 0.0
    %198 = vmatpush2.msra.mxu0 0.0
    %199 = vmatprep.subr.mxu0 0.0
    %200 = vmatpush2.msra.mxu0 0.0
    %201 = vmatprep.subr.mxu0 0.0
    %202 = vmatpush2.msra.mxu0 0.0
    %203 = vmatprep.subr.mxu0 0.0
    %204 = vmatpush2.msra.mxu0 0.0
    %205 = vmatprep.subr.mxu0 0.0
    %206 = vmatpush2.msra.mxu0 0.0
    %207 = vmatprep.subr.mxu0 0.0
    %208 = vmatpush2.msra.mxu0 0.0
    %209 = vmatprep.subr.mxu0 0.0
    %210 = vmatpush2.msra.mxu0 0.0
    %211 = vmatprep.subr.mxu0 0.0
    %212 = vmatpush2.msra.mxu0 0.0
    %213 = vmatprep.subr.mxu0 0.0
    %214 = vmatpush2.msra.mxu0 0.0
    %215 = vmatprep.subr.mxu0 0.0
    %216 = vmatpush2.msra.mxu0 0.0
    %217 = vmatprep.subr.mxu0 0.0
    %218 = vmatpush2.msra.mxu0 0.0
    %219 = vmatprep.subr.mxu0 0.0
    %220 = vmatpush2.msra.mxu0 0.0
    %221 = vmatprep.subr.mxu0 0.0
    %222 = vmatpush2.msra.mxu0 0.0
    %223 = vmatprep.subr.mxu0 0.0
    %224 = vmatpush2.msra.mxu0 0.0
    %225 = vmatprep.subr.mxu0 0.0
    %226 = vmatpush2.msra.mxu0 0.0
    %227 = vmatprep.mubr.f32.mxu0 0.0
    %228 = vmatmul.mubr.f32.gmra.mxu0 %v152
    %v229 = vpop.f32.mrf.mxu0
    %v230 = vadd.f32 %v133, %v229
    %v231 = vpop.f32.mrf.mxu0
    %232 = vmatprep.mubr.f32.mxu0 0.0
    %233 = vmatmul.mubr.f32.gmra.mxu0 %v155
    %v234 = vpop.f32.mrf.mxu0
    %v235 = vadd.f32 %v138, %v234
    %v236 = vpop.f32.mrf.mxu0
    %237 = vmatprep.mubr.f32.mxu0 0.0
    %238 = vmatmul.mubr.f32.gmra.mxu0 %v158
    %v239 = vpop.f32.mrf.mxu0
    %v240 = vadd.f32 %v143, %v239
    %v241 = vpop.f32.mrf.mxu0
    %242 = vmatprep.mubr.f32.mxu0 0.0
    %243 = vmatmul.mubr.f32.gmra.mxu0 %v161
    %v244 = vpop.f32.mrf.mxu0
    %v245 = vadd.f32 %v148, %v244
    %v246 = vpop.f32.mrf.mxu0
    %247 = vdwg.mxu0
    %v248 = vmax.f32 %v230, 0.0
    %v249 = vmax.f32 %v235, 0.0
    %v250 = vmax.f32 %v240, 0.0
    %v251 = vmax.f32 %v245, 0.0
    %v252 = vld [vmem:[%s5] sm:$0xff]
    %v253 = vld [vmem:[%s5 + $0x8] sm:$0xff]
    %v254 = vld [vmem:[%s5 + $0x10] sm:$0xff]
    %v255 = vld [vmem:[%s5 + $0x18] sm:$0xff]
    %257 = vset.pattern.permute.xlu0 0
    %258 = vperm.xlu0 %257, %v252
    %v259 = vpop.permute.xlu0 %258
    %262 = vset.pattern.permute.xlu0 0
    %263 = vperm.xlu0 %262, %v253
    %v264 = vpop.permute.xlu0 %263
    %267 = vset.pattern.permute.xlu0 0
    %268 = vperm.xlu0 %267, %v254
    %v269 = vpop.permute.xlu0 %268
    %272 = vset.pattern.permute.xlu0 0
    %273 = vperm.xlu0 %272, %v255
    %v274 = vpop.permute.xlu0 %273
    %v276 = vmul.f32 %v259, %v248
    %v277 = vmul.f32 %v264, %v249
    %v278 = vmul.f32 %v269, %v250
    %v279 = vmul.f32 %v274, %v251
    %v280 = vadd.f32 %v276, %v277
    %v281 = vadd.f32 %v280, %v278
    %v282 = vadd.f32 %v281, %v279
    %v283 = vrot.slane %v282, 4
    %v284 = vadd.f32 %v282, %v283
    %v285 = vrot.slane %v284, 2
    %v286 = vadd.f32 %v284, %v285
    %v287 = vrot.slane %v286, 1
    %v288 = vadd.f32 %v286, %v287
    %v289 = vld [vmem:[#allocation2] sm:$0x1]
    %291 = vset.pattern.permute.xlu0 0
    %292 = vperm.xlu0 %291, %v289
    %v293 = vpop.permute.xlu0 %292
    %v295 = vlaneseq
    %v296 = vshrl.u32 %v295, 7
    %v297 = vsub.s32 0, %v296
    %v298 = vrot.slane %v293, %v297
    %v299 = vadd.f32 %v288, %v298
    %300 = vrot.lane.b32.xlu0 %v299, 1
    %v301 = vpop.permute.xlu0 %300
    %v302 = vsub.f32 %v299, %v301
    %v303 = vmul.f32 %v302, -10.0
    %304 = vst [vmem:[#allocation3] sm:$0x1] %v303
    // Predicated region
    $region30: #{tpu_custom_call.1} parent=1 // pred_check
      _
    $region31: #{tpu_custom_call.1} parent=1 // pred_check_branch
      %306 = sbr.rel (0) target = $region33
    $region32: #{tpu_custom_call.1} parent=1 // pred_region
      %s308 = ssub.s32 16, 16
      %309 = vsyncadd [#allocation4], %s308
      %s311 = sshll.u32 [#allocation3], 4
      %s312 = int_to_ptr.vmem [resolvable:$true] %s311
      %314 = dma.vmem_to_hbm [thread:$0]  %s312, 16, %s7, [#allocation4]
    $region33: #{tpu_custom_call.1} parent=1 // pred_fallthru
      _
    // Predicated region
    $region34: #{tpu_custom_call.1} parent=1 // pred_check
      _
    $region35: #{tpu_custom_call.1} parent=1 // pred_check_branch
      %316 = sbr.rel (0) target = $region37
    $region36: #{tpu_custom_call.1} parent=1 // pred_region
      %317 = dma.done [#allocation4], 16
    $region37: #{tpu_custom_call.1} parent=1 // pred_fallthru
      _
    %318 = vsyncpa [#allocation4], 1

</llo_original>
